<compile_context>
chip_gen: v6e
topology: v6e:2x2x1
jax: 0.10.0
libtpu: 0.0.40
codegen_flags: <defaults>
</compile_context>

<pallas_src>
import math

import jax
import jax.numpy as jnp
from jax.experimental import pallas as pl
from jax.experimental.pallas import tpu as pltpu


def _dirichlet_laplace_params(alpha_param):
    """Logistic-normal (Laplace) approximation params for Dirichlet(softmax(alpha))."""
    K = alpha_param.shape[-1]
    a = jax.nn.softmax(alpha_param.reshape(1, K).astype(jnp.float32), axis=-1)
    log_a = jnp.log(a)
    mu = log_a - jnp.mean(log_a, axis=-1, keepdims=True)
    inv_a = 1.0 / a
    sigma2 = (1.0 - 2.0 / K) * inv_a + jnp.sum(inv_a, axis=-1, keepdims=True) / (K * K)
    return mu, jnp.sqrt(sigma2)                      # both (1, K) f32


def _choose_row_tile(n_rows, row_tile, sublane):
    """Largest useful row tile; >=2 tiles when possible so both v7x TensorCores get work."""
    if n_rows <= sublane:
        return n_rows                                # single full-extent block
    if n_rows <= row_tile:
        half = pl.cdiv(n_rows, 2)
        half = ((half + sublane - 1) // sublane) * sublane
        return min(n_rows, half)
    return row_tile


def _topic_prior_kernel(mu_ref, sigma_ref, eps_ref, theta_ref):
    # mu_ref, sigma_ref: (1, K) f32;  eps_ref: (TL, K) bf16/f32;  theta_ref: (TL, K) out dtype
    eps = eps_ref[...].astype(jnp.float32)
    z = mu_ref[...] + sigma_ref[...] * eps           # (1,K) broadcast fuses into the VPU fma
    # Keep the row-max subtraction: sigma ~ sqrt(K) (~11 for K=128), so z spans tens of units.
    z = z - jnp.max(z, axis=-1, keepdims=True)
    e_z = jnp.exp(z)
    theta_ref[...] = (e_z / jnp.sum(e_z, axis=-1, keepdims=True)).astype(theta_ref.dtype)


def topic_prior_forward(x, alpha_param, *, key=None, seed=0, row_tile=4096,
                        out_dtype=jnp.bfloat16, eps_dtype=jnp.bfloat16):
    """x: (B, L, ...) -- only B, L are used. alpha_param: (1, 1, K). Returns theta (B, L, K)."""
    B, L = x.shape[0], x.shape[1]
    K = alpha_param.shape[-1]
    N = B * L

    # ---- alpha-only math: computed once, at (1, K), outside the kernel ----
    mu, sigma = _dirichlet_laplace_params(alpha_param)

    # ---- Gaussian noise (streamed from HBM in a narrow dtype; compute stays f32 in-kernel) ----
    if key is None:
        key = jax.random.PRNGKey(seed)
    eps = jax.random.normal(key, (N, K), dtype=jnp.float32).astype(eps_dtype)

    # ---- row tiling over the flattened (B*L, K) sample matrix (K stays lane-dense) ----
    sublane = 16 if jnp.dtype(out_dtype).itemsize <= 2 else 8
    tl = _choose_row_tile(N, row_tile, sublane)
    num_tiles = pl.cdiv(N, tl)

    itemsize_out = jnp.dtype(out_dtype).itemsize
    itemsize_eps = jnp.dtype(eps_dtype).itemsize
    cost = pl.CostEstimate(
        flops=8 * N * K,                              # fma + max + sub + sum + div, roughly
        transcendentals=N * K,                        # exp
        bytes_accessed=N * K * (itemsize_out + itemsize_eps) + 2 * K * 4 * num_tiles,
    )

    theta_flat = pl.pallas_call(
        _topic_prior_kernel,
        out_shape=jax.ShapeDtypeStruct((N, K), out_dtype),
        grid=(num_tiles,),
        in_specs=[
            pl.BlockSpec((1, K), lambda i: (0, 0)),   # mu    (same block every step)
            pl.BlockSpec((1, K), lambda i: (0, 0)),   # sigma (same block every step)
            pl.BlockSpec((tl, K), lambda i: (i, 0)),  # eps
        ],
        out_specs=pl.BlockSpec((tl, K), lambda i: (i, 0)),
        compiler_params=pltpu.CompilerParams(
            dimension_semantics=("parallel",),
            vmem_limit_bytes=32 * 1024 * 1024,        # raise v5e's 16 MiB scoped default
        ),
        cost_estimate=cost,
    )(mu, sigma, eps)

    return theta_flat.reshape(B, L, K)


def topic_prior_reference(x, alpha_param, *, key, eps_dtype=jnp.bfloat16):
    """Pure-JAX reference with the same eps (for correctness cross-check)."""
    B, L = x.shape[0], x.shape[1]
    K = alpha_param.shape[-1]
    mu, sigma = _dirichlet_laplace_params(alpha_param)
    eps = jax.random.normal(key, (B * L, K), dtype=jnp.float32).astype(eps_dtype)
    z = mu + sigma * eps.astype(jnp.float32)
    return jax.nn.softmax(z, axis=-1).reshape(B, L, K)


if __name__ == "__main__":
    # Small shapes consistent with the module's forward (x contributes only B and L).
    B, L, V = 2, 8, 32
    K = 128                     # number of topics (lane-friendly)

    key = jax.random.PRNGKey(0)
    k_x, k_alpha, k_eps = jax.random.split(key, 3)

    x = jax.random.normal(k_x, (B, L, V), dtype=jnp.float32)

    # xavier_normal_ on a (1, 1, K) tensor: fan_in = fan_out = K -> std = sqrt(2 / (2K))
    xavier_std = math.sqrt(2.0 / (K + K))
    alpha_param = xavier_std * jax.random.normal(k_alpha, (1, 1, K), dtype=jnp.float32)

    theta = topic_prior_forward(x, alpha_param, key=k_eps)
    theta = jax.block_until_ready(theta)

    # Basic sanity: simplex output of the right shape.
    assert theta.shape == (B, L, K)
    theta_f32 = theta.astype(jnp.float32)
    assert bool(jnp.all(jnp.isfinite(theta_f32)))
    row_sums = jnp.sum(theta_f32, axis=-1)
    assert bool(jnp.all(jnp.abs(row_sums - 1.0) < 1.5e-2))   # bf16 output rounding

    # Cross-check against the pure-JAX reference (same eps).
    theta_ref = topic_prior_reference(x, alpha_param, key=k_eps)
    max_err = jnp.max(jnp.abs(theta_f32 - theta_ref))
    assert bool(max_err < 2.5e-2), float(max_err)

    print("KERNEL_OK")
</pallas_src>

<mosaic_0001>
module attributes {stable_mosaic.version = 11 : i64} {
  func.func @_topic_prior_kernel(%arg0: i32, %arg1: memref<1x128xf32, #tpu.memory_space<vmem>>, %arg2: memref<1x128xf32, #tpu.memory_space<vmem>>, %arg3: memref<16x128xbf16, #tpu.memory_space<vmem>>, %arg4: memref<16x128xbf16, #tpu.memory_space<vmem>>) attributes {dimension_semantics = [#tpu.dimension_semantics<parallel>], iteration_bounds = array<i64: 1>, scalar_prefetch = 0 : i64, scratch_operands = 0 : i64, tpu.core_type = #tpu.core_type<tc>, window_params = [{pipeline_mode = #tpu.pipeline_mode<synchronous>, transform_indices = @transform_0, window_bounds = array<i64: 1, 128>}, {pipeline_mode = #tpu.pipeline_mode<synchronous>, transform_indices = @transform_1, window_bounds = array<i64: 1, 128>}, {transform_indices = @transform_2, window_bounds = array<i64: 16, 128>}, {transform_indices = @transform_3, window_bounds = array<i64: 16, 128>}]} {
    %c0 = arith.constant 0 : index
    %c0_0 = arith.constant 0 : index
    %0 = vector.load %arg3[%c0, %c0_0] : memref<16x128xbf16, #tpu.memory_space<vmem>>, vector<16x128xbf16>
    %1 = arith.extf %0 : vector<16x128xbf16> to vector<16x128xf32>
    %c0_1 = arith.constant 0 : index
    %c0_2 = arith.constant 0 : index
    %2 = vector.load %arg1[%c0_1, %c0_2] : memref<1x128xf32, #tpu.memory_space<vmem>>, vector<1x128xf32>
    %c0_3 = arith.constant 0 : index
    %c0_4 = arith.constant 0 : index
    %3 = vector.load %arg2[%c0_3, %c0_4] : memref<1x128xf32, #tpu.memory_space<vmem>>, vector<1x128xf32>
    %4 = vector.broadcast %3 : vector<1x128xf32> to vector<16x128xf32>
    %5 = arith.mulf %4, %1 : vector<16x128xf32>
    %6 = vector.broadcast %2 : vector<1x128xf32> to vector<16x128xf32>
    %7 = arith.addf %6, %5 : vector<16x128xf32>
    %cst = arith.constant dense<0xFF800000> : vector<16xf32>
    %8 = vector.multi_reduction <maximumf>, %7, %cst [1] : vector<16x128xf32> to vector<16xf32>
    %9 = vector.shape_cast %8 : vector<16xf32> to vector<16x1xf32>
    %10 = vector.broadcast %9 : vector<16x1xf32> to vector<16x128xf32>
    %11 = arith.subf %7, %10 : vector<16x128xf32>
    %12 = math.exp %11 : vector<16x128xf32>
    %cst_5 = arith.constant dense<0.000000e+00> : vector<16xf32>
    %13 = vector.multi_reduction <add>, %12, %cst_5 [1] : vector<16x128xf32> to vector<16xf32>
    %14 = vector.shape_cast %13 : vector<16xf32> to vector<16x1xf32>
    %15 = vector.broadcast %14 : vector<16x1xf32> to vector<16x128xf32>
    %16 = arith.divf %12, %15 : vector<16x128xf32>
    %17 = arith.truncf %16 : vector<16x128xf32> to vector<16x128xbf16>
    %c0_6 = arith.constant 0 : index
    %c0_7 = arith.constant 0 : index
    %18 = vector.load %arg4[%c0_6, %c0_7] : memref<16x128xbf16, #tpu.memory_space<vmem>>, vector<16x128xbf16>
    tpu.vector_store %arg4[%c0_6, %c0_7], %17 {strides = array<i32>} : memref<16x128xbf16, #tpu.memory_space<vmem>>, vector<16x128xbf16>,
    return
  }
  func.func @transform_0(%arg0: i32) -> (i32, i32) {
    %c0_i32 = arith.constant 0 : i32
    %c0_i32_0 = arith.constant 0 : i32
    %c0_i32_1 = arith.constant 0 : i32
    return %c0_i32, %c0_i32_0 : i32, i32
  }
  func.func @transform_1(%arg0: i32) -> (i32, i32) {
    %c0_i32 = arith.constant 0 : i32
    %c0_i32_0 = arith.constant 0 : i32
    %c0_i32_1 = arith.constant 0 : i32
    return %c0_i32, %c0_i32_0 : i32, i32
  }
  func.func @transform_2(%arg0: i32) -> (i32, i32) {
    %c0_i32 = arith.constant 0 : i32
    %c0_i32_0 = arith.constant 0 : i32
    return %arg0, %c0_i32 : i32, i32
  }
  func.func @transform_3(%arg0: i32) -> (i32, i32) {
    %c0_i32 = arith.constant 0 : i32
    %c0_i32_0 = arith.constant 0 : i32
    return %arg0, %c0_i32 : i32, i32
  }
}

</mosaic_0001>

<llo_original>
// kernel: tpu_custom_call.1
$region0: #{tpu_custom_call.1}
  #allocation0 [shape = 'u32[]', space=smem, size = 0x4, offset = 0x4, fixed_abs, tag = 'smem constant byte address 0x4 - core index']
  #allocation1 [shape = 'u32[144,128]{1,0:T(1,128)}', space=vmem, size = 0x12000, scoped, tag = 'internal scratch']
  %s0 = inlined_call_operand.hbm [shape: f32[1,128], index: 0, kind: input, shape index: {}]
  %s1 = inlined_call_operand.vmem [shape: f32[1,128], index: 1, kind: input, shape index: {}]
  %s2 = inlined_call_operand.hbm [shape: bf16[16,128], index: 2, kind: input, shape index: {}]
  %s3 = inlined_call_operand.hbm [shape: bf16[16,128], index: 3, kind: output, shape index: {}]
  %s4 = sld [smem:[#allocation0]]
  $region30: #{tpu_custom_call.1} parent=0
    _
  %s6 = ssub.s32 1, %s4
  %s7 = scalar_select 0, %s6, %s4
  $region1: #{tpu_custom_call.1} parent=0
    #allocation2 [shape = 'u8[512]{0}', space=vmem, size = 0x400, scoped, tag = 'input window, operand 0, single buffered']
    #allocation3 [shape = 's32[1]{0}', space=sflag, size = 0x4, scoped, tag = 'scoped memory for tpu_custom_call.1']
    #allocation4 [shape = 's32[1]{0}', space=sflag, size = 0x4, scoped, tag = 'scoped memory for tpu_custom_call.1']
    #allocation5 [shape = 'u8[4096]{0}', space=vmem, size = 0x1000, scoped, tag = 'input window, operand 2, single buffered']
    #allocation6 [shape = 's32[1]{0}', space=sflag, size = 0x4, scoped, tag = 'scoped memory for tpu_custom_call.1']
    #allocation7 [shape = 'u8[4096]{0}', space=vmem, size = 0x1000, scoped, tag = 'output window, operand 0, single buffered']
    %8 = vsyncpa [#allocation3], 0
    %9 = vsyncpa [#allocation6], 0
    %10 = vsyncpa [#allocation4], 0
    // Predicated region
    $region2: #{tpu_custom_call.1} parent=1 // pred_check
      _
    $region3: #{tpu_custom_call.1} parent=1 // pred_check_branch
      %12 = sbr.rel (0) target = $region5
    $region4: #{tpu_custom_call.1} parent=1 // pred_region
      %s14 = ssub.s32 16, 16
      %15 = vsyncadd [#allocation3], %s14
      %s17 = sshll.u32 [#allocation2], 4
      %s18 = int_to_ptr.vmem [resolvable:$true] %s17
      %20 = dma.hbm_to_vmem [thread:$0]  %s0, 16, %s18, [#allocation3]
    $region5: #{tpu_custom_call.1} parent=1 // pred_fallthru
      _
    // Predicated region
    $region6: #{tpu_custom_call.1} parent=1 // pred_check
      _
    $region7: #{tpu_custom_call.1} parent=1 // pred_check_branch
      %22 = sbr.rel (0) target = $region9
    $region8: #{tpu_custom_call.1} parent=1 // pred_region
      _
    $region9: #{tpu_custom_call.1} parent=1 // pred_fallthru
      _
    // Predicated region
    $region10: #{tpu_custom_call.1} parent=1 // pred_check
      _
    $region11: #{tpu_custom_call.1} parent=1 // pred_check_branch
      %24 = sbr.rel (0) target = $region13
    $region12: #{tpu_custom_call.1} parent=1 // pred_region
      %s26 = ssub.s32 128, 128
      %27 = vsyncadd [#allocation6], %s26
      %s28 = sshll.u32 [#allocation5], 4
      %s29 = int_to_ptr.vmem [resolvable:$true] %s28
      %34 = dma.hbm_to_vmem [thread:$0]  %s2, 128, %s29, [#allocation6], 64, 64, 4
    $region13: #{tpu_custom_call.1} parent=1 // pred_fallthru
      _
    // Predicated region
    $region14: #{tpu_custom_call.1} parent=1 // pred_check
      _
    $region15: #{tpu_custom_call.1} parent=1 // pred_check_branch
      %36 = sbr.rel (0) target = $region17
    $region16: #{tpu_custom_call.1} parent=1 // pred_region
      %37 = dma.done [#allocation3], 16
    $region17: #{tpu_custom_call.1} parent=1 // pred_fallthru
      _
    // Predicated region
    $region18: #{tpu_custom_call.1} parent=1 // pred_check
      _
    $region19: #{tpu_custom_call.1} parent=1 // pred_check_branch
      %39 = sbr.rel (0) target = $region21
    $region20: #{tpu_custom_call.1} parent=1 // pred_region
      %40 = dma.done [#allocation6], 128
    $region21: #{tpu_custom_call.1} parent=1 // pred_fallthru
      _
    %v41 = vld [vmem:[#allocation5] sm:$0xf]
    %v42 = vld [vmem:[#allocation5 + $0x4] sm:$0xf]
    %v43 = vunpack.c.l.bf16 %v41
    %v44 = vunpack.c.l.bf16 %v42
    %v45 = vld [vmem:[#allocation2] sm:$0x1]
    %v46 = vld [vmem:[%s1] sm:$0x1]
    %v48 = vlaneseq
    %v49 = vshrl.u32 %v48, 7
    %v50 = vsub.s32 0, %v49
    %v51 = vrot.slane %v46, %v50
    %v53 = vmul.f32 %v51, %v43
    %v54 = vmul.f32 %v51, %v44
    %v56 = vlaneseq
    %v57 = vshrl.u32 %v56, 7
    %v58 = vsub.s32 0, %v57
    %v59 = vrot.slane %v45, %v58
    %v61 = vadd.f32 %v59, %v53
    %v62 = vadd.f32 %v59, %v54
    %63 = vmax.xlane.f32.xlu0 %v61
    %v64 = vpop.xlane.xlu0 %63
    %65 = vmax.xlane.f32.xlu0 %v62
    %v66 = vpop.xlane.xlu0 %65
    %v67 = vsub.f32 %v61, %v64
    %v68 = vsub.f32 %v62, %v66
    %v69 = vmul.f32 %v67, 1.442695
    %v70 = vpow.pop %v69
    %v71 = vmul.f32 %v68, 1.442695
    %v72 = vpow.pop %v71
    %73 = vadd.xlane.f32.xlu0 %v70
    %v74 = vpop.xlane.xlu0 %73
    %75 = vadd.xlane.f32.xlu0 %v72
    %v76 = vpop.xlane.xlu0 %75
    %v77 = vrcp.pop %v74
    %v78 = vmul.f32 %v70, %v77
    %v79 = vrcp.pop %v76
    %v80 = vmul.f32 %v72, %v79
    %v81 = vpack.c.bf16 %v80, %v78
    %v83 = vunpack.c.l.b16 %v81
    %v84 = vunpack.c.h.b16 %v81
    %v85 = vpack.c.b16 %v83, %v83
    %v86 = vpack.c.b16 %v84, %v84
    %89 = vst [vmem:[#allocation7] sm:$0xf] %v85
    %90 = vst [vmem:[#allocation7 + $0x4] sm:$0xf] %v86
    // Predicated region
    $region22: #{tpu_custom_call.1} parent=1 // pred_check
      _
    $region23: #{tpu_custom_call.1} parent=1 // pred_check_branch
      %92 = sbr.rel (0) target = $region25
    $region24: #{tpu_custom_call.1} parent=1 // pred_region
      %s94 = ssub.s32 128, 128
      %95 = vsyncadd [#allocation4], %s94
      %s96 = sshll.u32 [#allocation7], 4
      %s97 = int_to_ptr.vmem [resolvable:$true] %s96
      %102 = dma.vmem_to_hbm [thread:$0]  %s97, 128, %s3, [#allocation4], 64, 64, 4
    $region25: #{tpu_custom_call.1} parent=1 // pred_fallthru
      _
    // Predicated region
    $region26: #{tpu_custom_call.1} parent=1 // pred_check
      _
    $region27: #{tpu_custom_call.1} parent=1 // pred_check_branch
      %104 = sbr.rel (0) target = $region29
    $region28: #{tpu_custom_call.1} parent=1 // pred_region
      %105 = dma.done [#allocation4], 128
    $region29: #{tpu_custom_call.1} parent=1 // pred_fallthru
      _
    %106 = vsyncpa [#allocation3], 1
    %107 = vsyncpa [#allocation6], 1
    %108 = vsyncpa [#allocation4], 1

</llo_original>
